<compile_context>
chip_gen: v7x
topology: tpu7x:2x2x1
jax: 0.10.0
libtpu: 0.0.40
codegen_flags: <defaults>
</compile_context>

<pallas_src>
from typing import NamedTuple

import jax
import jax.numpy as jnp
from jax.experimental import pallas as pl
from jax.experimental.pallas import tpu as pltpu


# ----------------------------- sizing helpers -----------------------------

def _round_up(x, m):
    return -(-x // m) * m


def _detect_vmem_limit_bytes():
    """VMEM limit passed to every pallas_call, with headroom for residents/internal scratch."""
    try:
        cap = int(pltpu.get_tpu_info().vmem_capacity_bytes)   # 128 MiB v5e/v6e, 64 MiB v7x (per TC)
    except Exception:
        cap = 64 << 20                                        # conservative fallback (v7x-safe)
    return min((cap * 5) // 8, 80 << 20)                      # 80 MiB on v5e/v6e, 40 MiB on v7x


_VMEM_LIMIT_BYTES = _detect_vmem_limit_bytes()
# Per streamed buffer; x2 for double buffering keeps the streamed operand at ~half the limit.
_STREAM_TILE_BUDGET = _VMEM_LIMIT_BYTES // 4


class _Plan(NamedTuple):
    n0: int            # original num_spot
    tn: int            # lane-tile width (multiple of 128)
    n_tiles: int       # total column tiles
    n_par: int         # parallel split of the tile axis (2 engages v7x's 2nd TensorCore)
    tiles_per_par: int
    n_pad: int         # padded num_spot = tn * n_tiles


def _plan_tiles(n0, col_tile, row_bytes, budget, split):
    """Choose tn (multiple of 128) so one streamed (rows, tn) tile fits `budget`, pad N to tn."""
    n128 = _round_up(n0, 128)
    if col_tile is not None:
        assert col_tile % 128 == 0 and col_tile > 0, "col_tile must be a positive multiple of 128"
        tn = min(col_tile, n128)
    else:
        tn = max(128, min(n128, (budget // max(row_bytes, 1)) // 128 * 128))
    n_tiles = -(-n128 // tn)
    if split and n_tiles >= 2 and n_tiles % 2 == 1:
        n_tiles += 1                       # even tile count -> clean 2-way parallel split
    if col_tile is None and n_tiles > 1:
        # shrink tn to the smallest 128-multiple that still covers n128 (minimizes zero padding)
        tn = _round_up(-(-n128 // n_tiles), 128)
    n_par = 2 if (split and n_tiles >= 2) else 1
    return _Plan(n0=n0, tn=tn, n_tiles=n_tiles, n_par=n_par,
                 tiles_per_par=n_tiles // n_par, n_pad=tn * n_tiles)


def _pick_group_block(g, n128, stream_itemsize, budget):
    """Largest group block (<=8) dividing G whose minimal (gb,N,128) tile fits the budget,
    preferring gb with G//gb >= 2 so the 'parallel' group axis spans both v7x TensorCores."""
    divs = [d for d in range(1, min(g, 8) + 1) if g % d == 0]
    fits = [d for d in divs if d * n128 * 128 * stream_itemsize <= budget] or [1]
    par = [d for d in fits if g // d >= 2]
    return max(par) if par else max(fits)


def _pad_cols(x, n_pad):
    return x if x.shape[-1] == n_pad else jnp.pad(x, ((0, 0), (0, n_pad - x.shape[-1])))


# ----------------------------- Pallas kernels -----------------------------

def _quad_shared_kernel(bmm_ref, bcol_ref, a_ref, q_ref):
    """q[g] += sum_j (B_mm @ A[:, tile])[g, j] * B_f32[g, tile_j]  (shared precision matrix)."""
    j = pl.program_id(1)

    @pl.when(j == 0)
    def _():
        q_ref[...] = jnp.zeros_like(q_ref)

    t = jnp.dot(bmm_ref[...], a_ref[...], preferred_element_type=jnp.float32)   # (G, tn) f32
    q_ref[...] += jnp.sum(t * bcol_ref[...], axis=1, keepdims=True)[None]       # (1, G, 1)


def _quad_pergroup_kernel(bmm_ref, bcol_ref, a_ref, q_ref):
    """Group-batched quadratic forms with per-group precision matrices A_g (column-tiled)."""
    j = pl.program_id(1)

    @pl.when(j == 0)
    def _():
        q_ref[...] = jnp.zeros_like(q_ref)

    bmm = bmm_ref[0]                                   # (gb, N) stream dtype, resident
    a = a_ref[...]                                     # (gb, N, tn) stream dtype, streamed
    # batched (1,N) @ (N,tn) per group; the unit dim is added on-value (blocks stay 2-D/3-D dense)
    t = jax.lax.dot_general(bmm[:, None, :], a, (((2,), (1,)), ((0,), (0,))),
                            preferred_element_type=jnp.float32)                 # (gb, 1, tn)
    q_ref[...] += jnp.sum(t[:, 0, :] * bcol_ref[0], axis=1, keepdims=True)[None]  # (1, gb, 1)


def _kl_weighted_kernel(lhs_ref, logc_ref, w_ref, out_ref):
    """Weighted-KL numerator, one fused matmul per W column tile.

    lhs  rows 0..G-1 = p (stream dtype), row G = diag(p^T log p) (stream dtype)
    logc rows 0..G-1 = log(p + eps) (f32),     row G = -1
    num_tile = sum_i diag_i * sum_j W[i,j] - sum_{g,j} (P @ W)[g,j] log p[g,j]
             = -sum( (lhs @ W_tile) * logc_tile )
    """
    j = pl.program_id(1)

    @pl.when(j == 0)
    def _():
        out_ref[...] = jnp.zeros_like(out_ref)

    prod = jnp.dot(lhs_ref[...], w_ref[...], preferred_element_type=jnp.float32)  # (G+1, tn)
    out_ref[...] -= jnp.sum(prod * logc_ref[...], keepdims=True)[None]            # (1, 1, 1)


def _kl_noweight_kernel(p_ref, out_ref):
    """Unweighted KL numerator (kl.sum()) in closed form, O(G*N), no dense ones matrix."""
    p = p_ref[...]                                                 # (G, N) f32
    logp = jnp.log(p + 1e-20)
    n = p.shape[1]
    diag_sum = jnp.sum(p * logp, keepdims=True)                    # (1,1) = sum_i ce[i,i]
    ce_sum = jnp.sum(jnp.sum(p, axis=1, keepdims=True) *
                     jnp.sum(logp, axis=1, keepdims=True), keepdims=True)  # (1,1) = sum_ij ce[i,j]
    out_ref[...] = n * diag_sum - ce_sum


# ----------------------------- pallas_call wrappers -----------------------------

def _quad_shared_call(beta, a_stream, plan, stream_dtype):
    """diag(beta @ A @ beta.T) as a (G,) vector; A streamed in stream-dtype column tiles."""
    G = beta.shape[0]
    tn, tpp, n_par, n_pad = plan.tn, plan.tiles_per_par, plan.n_par, plan.n_pad
    beta32 = _pad_cols(beta.astype(jnp.float32), n_pad)
    bmm = beta32.astype(stream_dtype)                  # MXU lhs, cast once here (no in-kernel cast)
    out = pl.pallas_call(
        _quad_shared_kernel,
        out_shape=jax.ShapeDtypeStruct((n_par, G, 1), jnp.float32),
        grid=(n_par, tpp),
        in_specs=[pl.BlockSpec((G, n_pad), lambda s, j: (0, 0)),              # resident lhs
                  pl.BlockSpec((G, tn), lambda s, j: (0, s * tpp + j)),       # f32 elementwise tile
                  pl.BlockSpec((n_pad, tn), lambda s, j: (0, s * tpp + j))],  # A column tile
        out_specs=pl.BlockSpec((1, G, 1), lambda s, j: (s, 0, 0)),
        compiler_params=pltpu.CompilerParams(
            dimension_semantics=("parallel", "arbitrary"),
            vmem_limit_bytes=_VMEM_LIMIT_BYTES),
    )(bmm, beta32, a_stream)
    return jnp.sum(out, axis=0)[:, 0]                  # sum the per-TensorCore partials


def _quad_pergroup_call(beta, a_stream, plan, gb, stream_dtype):
    """q[g] = beta[g] @ A_g @ beta[g]; groups batched (gb per step), columns tiled."""
    G = beta.shape[0]
    assert a_stream.shape[0] == G and G % gb == 0
    n_pad, tn, n_tiles = plan.n_pad, plan.tn, plan.n_tiles
    beta32 = _pad_cols(beta.astype(jnp.float32), n_pad).reshape(G // gb, gb, n_pad)
    bmm = beta32.astype(stream_dtype)
    out = pl.pallas_call(
        _quad_pergroup_kernel,
        out_shape=jax.ShapeDtypeStruct((G // gb, gb, 1), jnp.float32),
        grid=(G // gb, n_tiles),
        in_specs=[pl.BlockSpec((1, gb, n_pad), lambda g, j: (g, 0, 0)),       # resident lhs rows
                  pl.BlockSpec((1, gb, tn), lambda g, j: (g, 0, j)),          # f32 elementwise tile
                  pl.BlockSpec((gb, n_pad, tn), lambda g, j: (g, 0, j))],     # A_g column tiles
        out_specs=pl.BlockSpec((1, gb, 1), lambda g, j: (g, 0, 0)),
        compiler_params=pltpu.CompilerParams(
            dimension_semantics=("parallel", "arbitrary"),
            vmem_limit_bytes=_VMEM_LIMIT_BYTES),
    )(bmm, beta32, a_stream)
    return out.reshape(G)


def _kl_weighted_call(p, w_stream, plan, nonzero_count, stream_dtype):
    """Mean pairwise KL divergence between spots, weighted by a spatial matrix."""
    G = p.shape[0]
    n_pad, tn, tpp, n_par = plan.n_pad, plan.tn, plan.tiles_per_par, plan.n_par
    pp = _pad_cols(p.astype(jnp.float32), n_pad)
    logp = jnp.log(pp + 1e-20)                                      # hoisted out of the kernel
    diag = jnp.sum(pp * logp, axis=0, keepdims=True)                # (1, n_pad) diag of p^T log p
    lhs = jnp.concatenate([pp, diag], axis=0).astype(stream_dtype)  # (G+1, n_pad) fused MXU lhs
    logc = jnp.concatenate([logp, -jnp.ones((1, n_pad), jnp.float32)], axis=0)  # (G+1, n_pad) f32
    out = pl.pallas_call(
        _kl_weighted_kernel,
        out_shape=jax.ShapeDtypeStruct((n_par, 1, 1), jnp.float32),
        grid=(n_par, tpp),
        in_specs=[pl.BlockSpec((G + 1, n_pad), lambda s, j: (0, 0)),            # resident fused lhs
                  pl.BlockSpec((G + 1, tn), lambda s, j: (0, s * tpp + j)),     # f32 log tiles
                  pl.BlockSpec((n_pad, tn), lambda s, j: (0, s * tpp + j))],    # W column tiles
        out_specs=pl.BlockSpec((1, 1, 1), lambda s, j: (s, 0, 0)),
        compiler_params=pltpu.CompilerParams(
            dimension_semantics=("parallel", "arbitrary"),
            vmem_limit_bytes=_VMEM_LIMIT_BYTES),
    )(lhs, logc, w_stream)
    return jnp.sum(out) / nonzero_count


def _kl_unweighted_call(p):
    """kl.mean() closed form; only O(G*N) data, no padding / tiling needed."""
    G, N0 = p.shape
    out = pl.pallas_call(
        _kl_noweight_kernel,
        out_shape=jax.ShapeDtypeStruct((1, 1), jnp.float32),
        grid=(1,),
        in_specs=[pl.BlockSpec((G, N0), lambda i: (0, 0))],
        out_specs=pl.BlockSpec((1, 1), lambda i: (0, 0)),
        compiler_params=pltpu.CompilerParams(vmem_limit_bytes=_VMEM_LIMIT_BYTES),
    )(p.astype(jnp.float32))
    return out[0, 0] / (N0 * N0)


def kl_loss_pallas(p, weights=None, *, col_tile=None, stream_dtype=jnp.bfloat16):
    """Standalone port of smoother.losses.kl_loss."""
    if weights is None:
        return _kl_unweighted_call(p)
    w = jnp.asarray(weights, jnp.float32)
    n0 = w.shape[0]
    itemsize = jnp.dtype(stream_dtype).itemsize
    plan = _plan_tiles(n0, col_tile, _round_up(n0, 128) * itemsize, _STREAM_TILE_BUDGET, split=True)
    w_stream = jnp.pad(w, ((0, plan.n_pad - n0), (0, plan.n_pad - n0))).astype(stream_dtype)
    nnz = jnp.sum((w_stream != 0).astype(jnp.float32))   # consistent with the streamed operand
    return _kl_weighted_call(p, w_stream, plan, nnz, stream_dtype)


# ----------------------------- module port -----------------------------

def _ring_adjacency(n):
    idx = jnp.arange(n)
    w = jnp.zeros((n, n), jnp.float32)
    w = w.at[idx, (idx + 1) % n].set(1.0)
    w = w.at[idx, (idx - 1) % n].set(1.0)
    return w


def _get_inv_cov(swm, prior, scale_weights):
    # TODO(synk): SpatialWeightMatrix.get_inv_cov (prior-specific construction, standardization)
    # is not ported; this is a deterministic SPD stand-in of the right shape (I + l * Laplacian).
    w = 0.5 * (swm + swm.T)
    d = jnp.diag(jnp.sum(w, axis=1))
    return jnp.eye(w.shape[0], dtype=jnp.float32) + jnp.float32(scale_weights) * (d - w)


class SpatialLoss:
    """JAX/Pallas port of smoother.losses.SpatialLoss forward pass."""

    def __init__(self, prior, spatial_weights=None, scale_weights=1.0,
                 use_sparse=True, standardize_cov=False,
                 col_tile=None, stream_dtype=jnp.bfloat16):
        valid_priors = ['kl', 'sma', 'sar', 'isar', 'car', 'icar']
        if prior not in valid_priors:
            raise NotImplementedError(f'Spatial prior currently must be one of {valid_priors}')
        if spatial_weights is None and prior != 'kl':
            raise ValueError('A spatial weight matrix must be supplied for spatial smoothing!')
        self.prior = prior
        self.spatial_weights = spatial_weights
        self.scale_weights = scale_weights
        self.use_sparse = use_sparse
        self.standardize_cov = standardize_cov
        self.col_tile = col_tile
        # bf16 streaming of the N^2 operand halves HBM traffic; pass jnp.float32 for exactness.
        self.stream_dtype = jnp.dtype(stream_dtype)
        itemsize = self.stream_dtype.itemsize

        if prior == 'kl':
            self._w_lo = None
            self._w_nnz = None
            self._plan = None
            if spatial_weights is not None:
                w = jnp.asarray(spatial_weights, jnp.float32)
                n0 = w.shape[0]
                self._plan = _plan_tiles(n0, col_tile, _round_up(n0, 128) * itemsize,
                                         _STREAM_TILE_BUDGET, split=True)
                pad = self._plan.n_pad - n0
                self._w_lo = jnp.pad(w, ((0, pad), (0, pad))).astype(self.stream_dtype)
                self._w_nnz = jnp.sum((self._w_lo != 0).astype(jnp.float32))
            return

        if not isinstance(spatial_weights, (list, tuple)):
            inv_cov = _get_inv_cov(jnp.asarray(spatial_weights, jnp.float32),
                                   prior, scale_weights)[None]
        else:
            inv_cov = jnp.stack(
                [_get_inv_cov(jnp.asarray(w, jnp.float32), prior, scale_weights)
                 for w in spatial_weights], axis=0)
        self.inv_cov = inv_cov                                     # (K, N, N) f32, torch attribute
        self.confidences = jnp.ones((inv_cov.shape[0],), jnp.float32)

        K, n0 = inv_cov.shape[0], inv_cov.shape[1]
        n128 = _round_up(n0, 128)
        if K == 1:
            self._gb = None
            self._plan = _plan_tiles(n0, col_tile, n128 * itemsize,
                                     _STREAM_TILE_BUDGET, split=True)
        else:
            self._gb = _pick_group_block(K, n128, itemsize, _STREAM_TILE_BUDGET)
            self._plan = _plan_tiles(n0, col_tile, self._gb * n128 * itemsize,
                                     _STREAM_TILE_BUDGET, split=False)
        pad = self._plan.n_pad - n0
        # padded, stream-dtype copy of the HBM-bound (K, N, N) precision stack (cast once at init)
        self._inv_cov_lo = jnp.pad(inv_cov, ((0, 0), (0, pad), (0, pad))).astype(self.stream_dtype)
        # The torch sparse block-diagonal path (use_sparse=True, prior != 'sma') is numerically
        # identical to the dense quadratic form; both paths share the dense kernels here.

    def __call__(self, coefs):
        coefs = jnp.asarray(coefs, jnp.float32)
        G, N0 = coefs.shape
        if self.prior == 'kl':
            p = jax.nn.softmax(coefs, axis=0)      # glue; the N^2-heavy work runs in the kernel
            if self._w_lo is None:
                return _kl_unweighted_call(p)
            return _kl_weighted_call(p, self._w_lo, self._plan, self._w_nnz, self.stream_dtype)
        if self.inv_cov.shape[0] == 1:
            q = _quad_shared_call(coefs, self._inv_cov_lo[0], self._plan, self.stream_dtype)
        else:
            assert self.inv_cov.shape[0] == G, "per-group covariance requires one matrix per group"
            q = _quad_pergroup_call(coefs, self._inv_cov_lo, self._plan, self._gb, self.stream_dtype)
        nll = jnp.sum(q * self.confidences)
        return nll / (G * N0)                      # normalize=True, as in the torch forward


# ----------------------------- pure-JAX references (demo only) -----------------------------

def _ref_quadratic(beta, inv_cov_lo_padded, scales, stream_dtype):
    G, N0 = beta.shape
    b_mm = beta.astype(stream_dtype).astype(jnp.float32)
    a = inv_cov_lo_padded.astype(jnp.float32)[:, :N0, :N0]
    if a.shape[0] == 1:
        t = b_mm @ a[0]
    else:
        t = jnp.einsum('gm,gmn->gn', b_mm, a)
    q = jnp.sum(t * beta, axis=1)
    return jnp.sum(q * scales) / (G * N0)


def _ref_kl_weighted(p, w_lo_padded, stream_dtype):
    N0 = p.shape[1]
    w = w_lo_padded.astype(jnp.float32)[:N0, :N0]
    logp = jnp.log(p + 1e-20)
    diag = jnp.sum(p * logp, axis=0, keepdims=True)
    p_mm = p.astype(stream_dtype).astype(jnp.float32)
    diag_mm = diag.astype(stream_dtype).astype(jnp.float32)
    term1 = jnp.sum(diag_mm @ w)
    term2 = jnp.sum((p_mm @ w) * logp)
    nnz = jnp.sum((w != 0).astype(jnp.float32))
    return (term1 - term2) / nnz


def _ref_kl_unweighted(p):
    p_ = p + 1e-20
    ce = jnp.einsum('gi,gj->ij', p_, jnp.log(p_), precision=jax.lax.Precision.HIGHEST)
    kl = jnp.diag(ce)[:, None] - ce
    return jnp.mean(kl)


# ----------------------------- demo -----------------------------

if __name__ == "__main__":
    key = jax.random.PRNGKey(0)
    num_group, num_spot = 8, 512
    coefs = jax.random.normal(key, (num_group, num_spot), dtype=jnp.float32)

    W = _ring_adjacency(num_spot)
    col_tile = 128   # force several column tiles -> exercises accumulation + the 2-way split

    # 1) icar prior, single shared spatial weight matrix (use_sparse path -> same dense kernel)
    loss_shared = SpatialLoss('icar', spatial_weights=W, scale_weights=1.0,
                              use_sparse=True, col_tile=col_tile)
    v1 = loss_shared(coefs)

    # 2) car prior, one weight matrix per group (per-group precision matrices)
    swm_list = [W * (1.0 + 0.25 * g) for g in range(num_group)]
    loss_pg = SpatialLoss('car', spatial_weights=swm_list, scale_weights=0.5,
                          use_sparse=False, col_tile=col_tile)
    v2 = loss_pg(coefs)

    # 3) kl prior with a spatial weight matrix
    loss_kl = SpatialLoss('kl', spatial_weights=W, col_tile=col_tile)
    v3 = loss_kl(coefs)

    # 4) kl_loss with weights=None (kl.mean() branch)
    p = jax.nn.softmax(coefs, axis=0)
    v4 = kl_loss_pallas(p, None)

    jax.block_until_ready((v1, v2, v3, v4))

    # References mirror the stream-dtype (bf16) rounding of the N^2 operands the kernels consume.
    sd = jnp.bfloat16
    r1 = _ref_quadratic(coefs, loss_shared._inv_cov_lo, loss_shared.confidences, sd)
    r2 = _ref_quadratic(coefs, loss_pg._inv_cov_lo, loss_pg.confidences, sd)
    r3 = _ref_kl_weighted(p, loss_kl._w_lo, sd)
    r4 = _ref_kl_unweighted(p)

    assert jnp.allclose(v1, r1, rtol=1e-3, atol=1e-6), (v1, r1)
    assert jnp.allclose(v2, r2, rtol=1e-3, atol=1e-6), (v2, r2)
    assert jnp.allclose(v3, r3, rtol=1e-3, atol=1e-6), (v3, r3)
    assert jnp.allclose(v4, r4, rtol=1e-3, atol=1e-6), (v4, r4)

    print("KERNEL_OK")
</pallas_src>

<mosaic_0001>
module attributes {stable_mosaic.version = 11 : i64} {
  func.func @_quad_shared_kernel(%arg0: i32, %arg1: i32, %arg2: memref<8x512xbf16, #tpu.memory_space<vmem>>, %arg3: memref<8x128xf32, #tpu.memory_space<vmem>>, %arg4: memref<512x128xbf16, #tpu.memory_space<vmem>>, %arg5: memref<1x8x1xf32, #tpu.memory_space<vmem>>) attributes {dimension_semantics = [#tpu.dimension_semantics<parallel>, #tpu.dimension_semantics<arbitrary>], iteration_bounds = array<i64: 2, 2>, scalar_prefetch = 0 : i64, scratch_operands = 0 : i64, tpu.core_type = #tpu.core_type<tc>, window_params = [{pipeline_mode = #tpu.pipeline_mode<synchronous>, transform_indices = @transform_0, window_bounds = array<i64: 8, 512>}, {transform_indices = @transform_1, window_bounds = array<i64: 8, 128>}, {transform_indices = @transform_2, window_bounds = array<i64: 512, 128>}, {transform_indices = @transform_3, window_bounds = array<i64: 1, 8, 1>}]} {
    %c0_i32 = arith.constant 0 : i32
    %0 = arith.cmpi eq, %arg1, %c0_i32 : i32
    %1 = arith.extui %0 : i1 to i32
    %c0_i32_0 = arith.constant 0 : i32
    %2 = arith.cmpi ne, %1, %c0_i32_0 : i32
    scf.if %2 {
      %cst_13 = arith.constant 0.000000e+00 : f32
      %14 = vector.broadcast %cst_13 : f32 to vector<1x8x1xf32>
      %c0_14 = arith.constant 0 : index
      %c0_15 = arith.constant 0 : index
      %c0_16 = arith.constant 0 : index
      %15 = vector.load %arg5[%c0_14, %c0_15, %c0_16] : memref<1x8x1xf32, #tpu.memory_space<vmem>>, vector<1x8x1xf32>
      tpu.vector_store %arg5[%c0_14, %c0_15, %c0_16], %14 {strides = array<i32>} : memref<1x8x1xf32, #tpu.memory_space<vmem>>, vector<1x8x1xf32>,
    } else {
    }
    %c0 = arith.constant 0 : index
    %c0_1 = arith.constant 0 : index
    %3 = vector.load %arg2[%c0, %c0_1] : memref<8x512xbf16, #tpu.memory_space<vmem>>, vector<8x512xbf16>
    %c0_2 = arith.constant 0 : index
    %c0_3 = arith.constant 0 : index
    %4 = vector.load %arg4[%c0_2, %c0_3] : memref<512x128xbf16, #tpu.memory_space<vmem>>, vector<512x128xbf16>
    %cst = arith.constant dense<0.000000e+00> : vector<8x128xf32>
    %5 = tpu.matmul %3, %4, %cst {dimension_numbers = #tpu.dot_dimension_numbers<[1], [0], [0], [1], [0, 0, 1, 1], [], []>} : vector<8x512xbf16>, vector<512x128xbf16>, vector<8x128xf32> -> vector<8x128xf32>
    %c0_4 = arith.constant 0 : index
    %c0_5 = arith.constant 0 : index
    %c0_6 = arith.constant 0 : index
    %6 = vector.load %arg5[%c0_4, %c0_5, %c0_6] : memref<1x8x1xf32, #tpu.memory_space<vmem>>, vector<1x8x1xf32>
    %c0_7 = arith.constant 0 : index
    %c0_8 = arith.constant 0 : index
    %7 = vector.load %arg3[%c0_7, %c0_8] : memref<8x128xf32, #tpu.memory_space<vmem>>, vector<8x128xf32>
    %8 = arith.mulf %5, %7 : vector<8x128xf32>
    %cst_9 = arith.constant dense<0.000000e+00> : vector<8xf32>
    %9 = vector.multi_reduction <add>, %8, %cst_9 [1] : vector<8x128xf32> to vector<8xf32>
    %10 = vector.shape_cast %9 : vector<8xf32> to vector<8x1xf32>
    %11 = vector.shape_cast %10 : vector<8x1xf32> to vector<1x8x1xf32>
    %12 = arith.addf %6, %11 : vector<1x8x1xf32>
    %c0_10 = arith.constant 0 : index
    %c0_11 = arith.constant 0 : index
    %c0_12 = arith.constant 0 : index
    %13 = vector.load %arg5[%c0_10, %c0_11, %c0_12] : memref<1x8x1xf32, #tpu.memory_space<vmem>>, vector<1x8x1xf32>
    tpu.vector_store %arg5[%c0_10, %c0_11, %c0_12], %12 {strides = array<i32>} : memref<1x8x1xf32, #tpu.memory_space<vmem>>, vector<1x8x1xf32>,
    return
  }
  func.func @transform_0(%arg0: i32, %arg1: i32) -> (i32, i32) {
    %c0_i32 = arith.constant 0 : i32
    %c0_i32_0 = arith.constant 0 : i32
    %c0_i32_1 = arith.constant 0 : i32
    return %c0_i32, %c0_i32_0 : i32, i32
  }
  func.func @transform_1(%arg0: i32, %arg1: i32) -> (i32, i32) {
    %c2_i32 = arith.constant 2 : i32
    %0 = arith.muli %arg0, %c2_i32 : i32
    %1 = arith.addi %0, %arg1 : i32
    %c0_i32 = arith.constant 0 : i32
    %c0_i32_0 = arith.constant 0 : i32
    return %c0_i32, %1 : i32, i32
  }
  func.func @transform_2(%arg0: i32, %arg1: i32) -> (i32, i32) {
    %c2_i32 = arith.constant 2 : i32
    %0 = arith.muli %arg0, %c2_i32 : i32
    %1 = arith.addi %0, %arg1 : i32
    %c0_i32 = arith.constant 0 : i32
    %c0_i32_0 = arith.constant 0 : i32
    return %c0_i32, %1 : i32, i32
  }
  func.func @transform_3(%arg0: i32, %arg1: i32) -> (i32, i32, i32) {
    %c0_i32 = arith.constant 0 : i32
    %c0_i32_0 = arith.constant 0 : i32
    %c0_i32_1 = arith.constant 0 : i32
    return %arg0, %c0_i32, %c0_i32_0 : i32, i32, i32
  }
}

</mosaic_0001>

<llo_original>
// kernel: tpu_custom_call.1
$region0: #{tpu_custom_call.1}
  #allocation0 [shape = 'u32[]', space=smem, size = 0x4, offset = 0x4, fixed_abs, tag = 'smem constant byte address 0x4 - core index']
  #allocation1 [shape = 'u32[144,128]{1,0:T(1,128)}', space=vmem, size = 0x12000, scoped, tag = 'internal scratch']
  %s0 = inlined_call_operand.hbm [shape: bf16[8,512], index: 0, kind: input, shape index: {}]
  %s1 = inlined_call_operand.hbm [shape: f32[8,512], index: 1, kind: input, shape index: {}]
  %s2 = inlined_call_operand.hbm [shape: bf16[512,512], index: 2, kind: input, shape index: {}]
  %s3 = inlined_call_operand.vmem [shape: f32[2,8,1], index: 3, kind: output, shape index: {}]
  %s4 = sld [smem:[#allocation0]]
  $region61: #{tpu_custom_call.1} parent=0
    _
  %s6 = ssub.s32 1, %s4
  %s7 = scalar_select 0, %s6, %s4
  $region1: #{tpu_custom_call.1} parent=0
    #allocation2 [shape = 'u8[8192]{0}', space=vmem, size = 0x2000, scoped, tag = 'input window, operand 0, single buffered']
    #allocation3 [shape = 's32[2]{0}', space=sflag, size = 0x8, scoped, tag = 'scoped memory for tpu_custom_call.1']
    #allocation4 [shape = 'u8[8192]{0}', space=vmem, size = 0x2000, scoped, tag = 'input window, operand 1']
    #allocation5 [shape = 's32[2]{0}', space=sflag, size = 0x8, scoped, tag = 'scoped memory for tpu_custom_call.1']
    #allocation6 [shape = 'u8[262144]{0}', space=vmem, size = 0x40000, scoped, tag = 'input window, operand 2']
    %8 = vsyncpa [#allocation3], 0
    %9 = vsyncpa [#allocation5], 0
    %s10 = scalar_lea.sflag [#allocation5], 1
    %11 = vsyncpa %s10, 0
    loop: start=0, step=1, limit=6
    $region2: #{tpu_custom_call.1} parent=1 // loop_pre_header
      _
    $region3: #{tpu_custom_call.1} parent=1 // loop_header
      %s13 = sphi 0, %s17
      %p14 = scmp.ge.s32.totalorder %s13, 6
      %s20 = sphi 0, %s32
      %s21 = sphi 0, %s28
      %s22 = sphi 0, %s20
      %s23 = sphi 0, %s21
      %s24 = sphi 0, %s22
      %s25 = sphi 0, %s23
      %s33 = sphi 0, %s33
      %s35 = sphi 0, %s33
      %s36 = sphi 0, %s35
      %s50 = sphi 0, %s36
      %s60 = sphi 0, %s62
      %s63 = sphi 0, %s60
      %s64 = sphi 0, %s63
      %s80 = sphi 0, %s64
      %s90 = sphi 0, %s92
      %s93 = sphi 0, %s90
      %s94 = sphi 0, %s93
      %s110 = sphi 0, %s94
      %s116 = sphi 0, %s118
      %s119 = sphi 0, %s116
      %s120 = sphi 0, %s119
      %s136 = sphi 0, %s120
    $region4: #{tpu_custom_call.1} parent=1 // loop_header_branch
      %16 = sbr.rel (%p14) target = $region8
    $region5: #{tpu_custom_call.1} parent=1 // loop_body
      %s18 = ssub.s32 %s13, 1
      %s19 = ssub.s32 %s13, 2
      %s26 = sadd.s32 1, %s21
      %p27 = scmp.ge.s32.totalorder %s26, 2
      %s28 = scalar_select %p27, 0, %s26
      %s29 = sadd.s32 1, %s20
      %s30 = scalar_select %p27, %s29, %s20
      %p31 = scmp.ge.s32.totalorder %s30, 2
      %s32 = scalar_select %p31, 0, %s30
      %s34 = sadd.s32 %s33, 1
      %p37 = scmp.eq.s32.totalorder %s13, 3
      %p38 = scmp.ne.s32.totalorder %s33, %s35
      %p39 = scmp.eq.s32.totalorder %s13, 0
      %p40 = por %p38, %p39
      %p41 = scmp.ne.s32.totalorder %s33, %s35
      %p42 = scmp.eq.s32.totalorder %s18, 3
      %p43 = por %p41, %p42
      %p44 = scmp.ne.s32.totalorder %s35, %s36
      %p45 = scmp.eq.s32.totalorder %s18, 0
      %p46 = por %p44, %p45
      %p47 = scmp.ne.s32.totalorder %s35, %s36
      %p48 = scmp.eq.s32.totalorder %s19, 3
      %p49 = por %p47, %p48
      %p51 = scmp.ne.s32.totalorder %s36, %s50
      %p52 = scmp.eq.s32.totalorder %s19, 0
      %p53 = por %p51, %p52
      %s54 = smul.u32 %s20, 2
      %s55 = sadd.s32 %s54, %s21
      %s56 = smul.u32 %s32, 2
      %s57 = sadd.s32 %s56, %s28
      %s58 = ssub.s32 %s55, %s57
      %p59 = scmp.eq.s32.totalorder %s58, 0
      %s61 = sadd.s32 %s60, 1
      %s62 = scalar_select %p59, %s60, %s61
      %p65 = pneg %p59
      %p66 = scmp.eq.s32.totalorder %s13, 3
      %p67 = por %p65, %p66
      %p68 = scmp.ne.s32.totalorder %s60, %s63
      %p69 = scmp.eq.s32.totalorder %s13, 0
      %p70 = por %p68, %p69
      %p71 = scmp.ne.s32.totalorder %s60, %s63
      %p72 = scmp.eq.s32.totalorder %s18, 3
      %p73 = por %p71, %p72
      %p74 = scmp.ne.s32.totalorder %s63, %s64
      %p75 = scmp.eq.s32.totalorder %s18, 0
      %p76 = por %p74, %p75
      %p77 = scmp.ne.s32.totalorder %s63, %s64
      %p78 = scmp.eq.s32.totalorder %s19, 3
      %p79 = por %p77, %p78
      %p81 = scmp.ne.s32.totalorder %s64, %s80
      %p82 = scmp.eq.s32.totalorder %s19, 0
      %p83 = por %p81, %p82
      %s84 = smul.u32 %s20, 2
      %s85 = sadd.s32 %s84, %s21
      %s86 = smul.u32 %s32, 2
      %s87 = sadd.s32 %s86, %s28
      %s88 = ssub.s32 %s85, %s87
      %p89 = scmp.eq.s32.totalorder %s88, 0
      %s91 = sadd.s32 %s90, 1
      %s92 = scalar_select %p89, %s90, %s91
      %p95 = pneg %p89
      %p96 = scmp.eq.s32.totalorder %s13, 3
      %p97 = por %p95, %p96
      %p98 = scmp.ne.s32.totalorder %s90, %s93
      %p99 = scmp.eq.s32.totalorder %s13, 0
      %p100 = por %p98, %p99
      %p101 = scmp.ne.s32.totalorder %s90, %s93
      %p102 = scmp.eq.s32.totalorder %s18, 3
      %p103 = por %p101, %p102
      %p104 = scmp.ne.s32.totalorder %s93, %s94
      %p105 = scmp.eq.s32.totalorder %s18, 0
      %p106 = por %p104, %p105
      %p107 = scmp.ne.s32.totalorder %s93, %s94
      %p108 = scmp.eq.s32.totalorder %s19, 3
      %p109 = por %p107, %p108
      %p111 = scmp.ne.s32.totalorder %s94, %s110
      %p112 = scmp.eq.s32.totalorder %s19, 0
      %p113 = por %p111, %p112
      %s114 = ssub.s32 %s20, %s32
      %p115 = scmp.eq.s32.totalorder %s114, 0
      %s117 = sadd.s32 %s116, 1
      %s118 = scalar_select %p115, %s116, %s117
      %p121 = pneg %p115
      %p122 = scmp.eq.s32.totalorder %s13, 3
      %p123 = por %p121, %p122
      %p124 = scmp.ne.s32.totalorder %s116, %s119
      %p125 = scmp.eq.s32.totalorder %s13, 0
      %p126 = por %p124, %p125
      %p127 = scmp.ne.s32.totalorder %s116, %s119
      %p128 = scmp.eq.s32.totalorder %s18, 3
      %p129 = por %p127, %p128
      %p130 = scmp.ne.s32.totalorder %s119, %s120
      %p131 = scmp.eq.s32.totalorder %s18, 0
      %p132 = por %p130, %p131
      %p133 = scmp.ne.s32.totalorder %s119, %s120
      %p134 = scmp.eq.s32.totalorder %s19, 3
      %p135 = por %p133, %p134
      %p137 = scmp.ne.s32.totalorder %s120, %s136
      %p138 = scmp.eq.s32.totalorder %s19, 0
      %p139 = por %p137, %p138
      %p140 = scmp.le.s32.totalorder 1, %s13
      %p141 = scmp.lt.s32.totalorder %s13, 5
      %p142 = pnand %p140, %p141
      %p143 = pneg %p142
      // Predicated region
      $region9: #{tpu_custom_call.1} parent=5 // pred_check
        _
      $region10: #{tpu_custom_call.1} parent=5 // pred_check_branch
        %145 = sbr.rel (%p142) target = $region12
      $region11: #{tpu_custom_call.1} parent=5 // pred_region
        %s146 = ssub.s32 %s13, 1
        // Predicated region
        $region13: #{tpu_custom_call.1} parent=11 // pred_check
          %p147 = pneg %p46
        $region14: #{tpu_custom_call.1} parent=11 // pred_check_branch
          %149 = sbr.rel (%p147) target = $region16
        $region15: #{tpu_custom_call.1} parent=11 // pred_region
          %s151 = ssub.s32 256, 256
          %152 = vsyncadd [#allocation3], %s151
          %s154 = sshll.u32 [#allocation2], 4
          %s155 = int_to_ptr.vmem [resolvable:$true] %s154
          %157 = dma.hbm_to_vmem [thread:$0]  %s0, 256, %s155, [#allocation3]
        $region16: #{tpu_custom_call.1} parent=11 // pred_fallthru
          _
      $region12: #{tpu_custom_call.1} parent=5 // pred_fallthru
        _
      %p158 = scmp.lt.s32.totalorder %s13, 4
      // Predicated region
      $region17: #{tpu_custom_call.1} parent=5 // pred_check
        %p159 = pneg %p158
      $region18: #{tpu_custom_call.1} parent=5 // pred_check_branch
        %161 = sbr.rel (%p159) target = $region20
      $region19: #{tpu_custom_call.1} parent=5 // pred_region
        // Predicated region
        $region21: #{tpu_custom_call.1} parent=19 // pred_check
          %p162 = pneg %p70
        $region22: #{tpu_custom_call.1} parent=19 // pred_check_branch
          %164 = sbr.rel (%p162) target = $region24
        $region23: #{tpu_custom_call.1} parent=19 // pred_region
          %s165 = sand.u32 %s13, 1
          %s166 = scalar_lea.sflag [#allocation5], %s165
          %s167 = sand.u32 %s60, 1
          %s168 = smul.addr %s167, 8
          %s169 = scalar_lea.vmem [#allocation4], %s168
          %s170 = smul.u32 %s20, 2
          %s171 = sadd.s32 %s170, %s21
          %s173 = ssub.s32 128, 128
          %174 = vsyncadd %s166, %s173
          %s175 = smul.addr %s171, 128
          %s176 = scalar_lea.hbm %s1, %s175
          %s178 = sshll.u32 %s169, 4
          %s179 = int_to_ptr.vmem [resolvable:$true] %s178
          %181 = dma.hbm_to_vmem [thread:$0]  %s176, 128, %s179, %s166
        $region24: #{tpu_custom_call.1} parent=19 // pred_fallthru
          _
        // Predicated region
        $region25: #{tpu_custom_call.1} parent=19 // pred_check
          %p182 = pneg %p100
        $region26: #{tpu_custom_call.1} parent=19 // pred_check_branch
          %184 = sbr.rel (%p182) target = $region28
        $region27: #{tpu_custom_call.1} parent=19 // pred_region
          %s185 = sand.u32 %s13, 1
          %s186 = scalar_lea.sflag [#allocation5], %s185
          %s187 = sand.u32 %s90, 1
          %s188 = smul.addr %s187, 256
          %s189 = scalar_lea.vmem [#allocation6], %s188
          %s190 = smul.u32 %s20, 2
          %s191 = sadd.s32 %s190, %s21
          %s193 = ssub.s32 4096, 4096
          %194 = vsyncadd %s186, %s193
          %s195 = smul.addr %s191, 64
          %s196 = scalar_lea.hbm %s2, %s195
          %s197 = sshll.u32 %s189, 4
          %s198 = int_to_ptr.vmem [resolvable:$true] %s197
          %203 = dma.hbm_to_vmem [thread:$0]  %s196, 4096, %s198, %s186, 256, 64, 4
        $region28: #{tpu_custom_call.1} parent=19 // pred_fallthru
          _
      $region20: #{tpu_custom_call.1} parent=5 // pred_fallthru
        _
      %p204 = scmp.le.s32.totalorder 1, %s13
      %p205 = scmp.lt.s32.totalorder %s13, 5
      %p206 = pnand %p204, %p205
      %p207 = pneg %p206
      // Predicated region
      $region29: #{tpu_custom_call.1} parent=5 // pred_check
        _
      $region30: #{tpu_custom_call.1} parent=5 // pred_check_branch
        %209 = sbr.rel (%p206) target = $region32
      $region31: #{tpu_custom_call.1} parent=5 // pred_region
        %s210 = ssub.s32 %s13, 1
        // Predicated region
        $region33: #{tpu_custom_call.1} parent=31 // pred_check
          %p211 = pneg %p46
        $region34: #{tpu_custom_call.1} parent=31 // pred_check_branch
          %213 = sbr.rel (%p211) target = $region36
        $region35: #{tpu_custom_call.1} parent=31 // pred_region
          %214 = dma.done [#allocation3], 256
        $region36: #{tpu_custom_call.1} parent=31 // pred_fallthru
          _
        %s215 = sand.u32 %s18, 1
        %s216 = scalar_lea.sflag [#allocation5], %s215
        %s217 = sand.u32 %s63, 1
        %s218 = smul.addr %s217, 8
        %s219 = scalar_lea.vmem [#allocation4], %s218
        // Predicated region
        $region37: #{tpu_custom_call.1} parent=31 // pred_check
          %p220 = pneg %p76
        $region38: #{tpu_custom_call.1} parent=31 // pred_check_branch
          %222 = sbr.rel (%p220) target = $region40
        $region39: #{tpu_custom_call.1} parent=31 // pred_region
          %223 = dma.done %s216, 128
        $region40: #{tpu_custom_call.1} parent=31 // pred_fallthru
          _
        %s224 = sand.u32 %s18, 1
        %s225 = scalar_lea.sflag [#allocation5], %s224
        %s226 = sand.u32 %s93, 1
        %s227 = smul.addr %s226, 256
        %s228 = scalar_lea.vmem [#allocation6], %s227
        // Predicated region
        $region41: #{tpu_custom_call.1} parent=31 // pred_check
          %p229 = pneg %p106
        $region42: #{tpu_custom_call.1} parent=31 // pred_check_branch
          %231 = sbr.rel (%p229) target = $region44
        $region43: #{tpu_custom_call.1} parent=31 // pred_region
          %232 = dma.done %s225, 4096
        $region44: #{tpu_custom_call.1} parent=31 // pred_fallthru
          _
        %p233 = pneg %p46
        %p234 = pneg %p43
        %s235 = sand.u32 %s18, 1
        %s236 = scalar_lea.sflag [#allocation5], %s235
        %s237 = sand.u32 %s63, 1
        %s238 = smul.addr %s237, 8
        %s239 = scalar_lea.vmem [#allocation4], %s238
        %p240 = pneg %p76
        %p241 = pneg %p73
        %s242 = sand.u32 %s18, 1
        %s243 = scalar_lea.sflag [#allocation5], %s242
        %s244 = sand.u32 %s93, 1
        %s245 = smul.addr %s244, 256
        %s246 = scalar_lea.vmem [#allocation6], %s245
        %p247 = pneg %p106
        %p248 = pneg %p103
        %p249 = pneg %p132
        %p250 = pneg %p129
        %p251 = scmp.lt.s32.totalorder %s22, 1
        %s252 = scalar_select %p251, %s22, 1
        %s253 = smul.addr %s252, 8
        %s254 = scalar_lea.vmem %s3, %s253
        %s255 = smul.u32 %s22, 2
        %s256 = sadd.s32 %s255, %s23
        %s257 = smul.u32 %s22, 2
        %s258 = sadd.s32 %s257, %s23
        %p259 = scmp.lt.s32.totalorder %s22, 1
        %s260 = scalar_select %p259, %s22, 1
        %s261 = smul.addr %s260, 8
        %s262 = scalar_lea.vmem %s3, %s261
        %p264 = scmp.eq.s32.totalorder %s23, 0
        // Predicated region
        $region45: #{tpu_custom_call.1} parent=31 // pred_check
          %p265 = pneg %p264
        $region46: #{tpu_custom_call.1} parent=31 // pred_check_branch
          %267 = sbr.rel (%p265) target = $region48
        $region47: #{tpu_custom_call.1} parent=31 // pred_region
          %vm268 = vcmask 7168
          %269 = vst.msk [vmem:[%s262] sm:$0xff] %vm268, 0.0
        $region48: #{tpu_custom_call.1} parent=31 // pred_fallthru
          _
        %v270 = vld [vmem:[#allocation2] sm:$0xff]
        %v271 = vld [vmem:[#allocation2 + $0x8] sm:$0xff]
        %v272 = vld [vmem:[%s228] sm:$0xf]
        %v273 = vld [vmem:[%s228 + $0x4] sm:$0xf]
        %v274 = vld [vmem:[%s228 + $0x8] sm:$0xf]
        %v275 = vld [vmem:[%s228 + $0xc] sm:$0xf]
        %v276 = vld [vmem:[%s228 + $0x10] sm:$0xf]
        %v277 = vld [vmem:[%s228 + $0x14] sm:$0xf]
        %v278 = vld [vmem:[%s228 + $0x18] sm:$0xf]
        %v279 = vld [vmem:[%s228 + $0x1c] sm:$0xf]
        %v280 = vld [vmem:[%s228 + $0x20] sm:$0xf]
        %v281 = vld [vmem:[%s228 + $0x24] sm:$0xf]
        %v282 = vld [vmem:[%s228 + $0x28] sm:$0xf]
        %v283 = vld [vmem:[%s228 + $0x2c] sm:$0xf]
        %v284 = vld [vmem:[%s228 + $0x30] sm:$0xf]
        %v285 = vld [vmem:[%s228 + $0x34] sm:$0xf]
        %v286 = vld [vmem:[%s228 + $0x38] sm:$0xf]
        %v287 = vld [vmem:[%s228 + $0x3c] sm:$0xf]
        %v288 = vld [vmem:[%s228 + $0x40] sm:$0xf]
        %v289 = vld [vmem:[%s228 + $0x44] sm:$0xf]
        %v290 = vld [vmem:[%s228 + $0x48] sm:$0xf]
        %v291 = vld [vmem:[%s228 + $0x4c] sm:$0xf]
        %v292 = vld [vmem:[%s228 + $0x50] sm:$0xf]
        %v293 = vld [vmem:[%s228 + $0x54] sm:$0xf]
        %v294 = vld [vmem:[%s228 + $0x58] sm:$0xf]
        %v295 = vld [vmem:[%s228 + $0x5c] sm:$0xf]
        %v296 = vld [vmem:[%s228 + $0x60] sm:$0xf]
        %v297 = vld [vmem:[%s228 + $0x64] sm:$0xf]
        %v298 = vld [vmem:[%s228 + $0x68] sm:$0xf]
        %v299 = vld [vmem:[%s228 + $0x6c] sm:$0xf]
        %v300 = vld [vmem:[%s228 + $0x70] sm:$0xf]
        %v301 = vld [vmem:[%s228 + $0x74] sm:$0xf]
        %v302 = vld [vmem:[%s228 + $0x78] sm:$0xf]
        %v303 = vld [vmem:[%s228 + $0x7c] sm:$0xf]
        %v304 = vld [vmem:[%s228 + $0x80] sm:$0xf]
        %v305 = vld [vmem:[%s228 + $0x84] sm:$0xf]
        %v306 = vld [vmem:[%s228 + $0x88] sm:$0xf]
        %v307 = vld [vmem:[%s228 + $0x8c] sm:$0xf]
        %v308 = vld [vmem:[%s228 + $0x90] sm:$0xf]
        %v309 = vld [vmem:[%s228 + $0x94] sm:$0xf]
        %v310 = vld [vmem:[%s228 + $0x98] sm:$0xf]
        %v311 = vld [vmem:[%s228 + $0x9c] sm:$0xf]
        %v312 = vld [vmem:[%s228 + $0xa0] sm:$0xf]
        %v313 = vld [vmem:[%s228 + $0xa4] sm:$0xf]
        %v314 = vld [vmem:[%s228 + $0xa8] sm:$0xf]
        %v315 = vld [vmem:[%s228 + $0xac] sm:$0xf]
        %v316 = vld [vmem:[%s228 + $0xb0] sm:$0xf]
        %v317 = vld [vmem:[%s228 + $0xb4] sm:$0xf]
        %v318 = vld [vmem:[%s228 + $0xb8] sm:$0xf]
        %v319 = vld [vmem:[%s228 + $0xbc] sm:$0xf]
        %v320 = vld [vmem:[%s228 + $0xc0] sm:$0xf]
        %v321 = vld [vmem:[%s228 + $0xc4] sm:$0xf]
        %v322 = vld [vmem:[%s228 + $0xc8] sm:$0xf]
        %v323 = vld [vmem:[%s228 + $0xcc] sm:$0xf]
        %v324 = vld [vmem:[%s228 + $0xd0] sm:$0xf]
        %v325 = vld [vmem:[%s228 + $0xd4] sm:$0xf]
        %v326 = vld [vmem:[%s228 + $0xd8] sm:$0xf]
        %v327 = vld [vmem:[%s228 + $0xdc] sm:$0xf]
        %v328 = vld [vmem:[%s228 + $0xe0] sm:$0xf]
        %v329 = vld [vmem:[%s228 + $0xe4] sm:$0xf]
        %v330 = vld [vmem:[%s228 + $0xe8] sm:$0xf]
        %v331 = vld [vmem:[%s228 + $0xec] sm:$0xf]
        %v332 = vld [vmem:[%s228 + $0xf0] sm:$0xf]
        %v333 = vld [vmem:[%s228 + $0xf4] sm:$0xf]
        %v334 = vld [vmem:[%s228 + $0xf8] sm:$0xf]
        %v335 = vld [vmem:[%s228 + $0xfc] sm:$0xf]
        %v338 = vunpack.c.l.b16 %v270
        %v339 = vunpack.c.h.b16 %v270
        %v340 = vunpack.c.l.b16 %v271
        %v341 = vunpack.c.h.b16 %v271
        %v342 = vpack.c.b16 %v338, %v338
        %v343 = vpack.c.b16 %v339, %v339
        %v344 = vpack.c.b16 %v340, %v340
        %v345 = vpack.c.b16 %v341, %v341
        %v414 = vunpack.c.l.b16 %v272
        %v415 = vunpack.c.l.b16 %v273
        %v416 = vunpack.c.l.b16 %v274
        %v417 = vunpack.c.l.b16 %v275
        %v418 = vunpack.c.l.b16 %v276
        %v419 = vunpack.c.l.b16 %v277
        %v420 = vunpack.c.l.b16 %v278
        %v421 = vunpack.c.l.b16 %v279
        %v422 = vunpack.c.l.b16 %v280
        %v423 = vunpack.c.l.b16 %v281
        %v424 = vunpack.c.l.b16 %v282
        %v425 = vunpack.c.l.b16 %v283
        %v426 = vunpack.c.l.b16 %v284
        %v427 = vunpack.c.l.b16 %v285
        %v428 = vunpack.c.l.b16 %v286
        %v429 = vunpack.c.l.b16 %v287
        %v430 = vunpack.c.l.b16 %v288
        %v431 = vunpack.c.l.b16 %v289
        %v432 = vunpack.c.l.b16 %v290
        %v433 = vunpack.c.l.b16 %v291
        %v434 = vunpack.c.l.b16 %v292
        %v435 = vunpack.c.l.b16 %v293
        %v436 = vunpack.c.l.b16 %v294
        %v437 = vunpack.c.l.b16 %v295
        %v438 = vunpack.c.l.b16 %v296
        %v439 = vunpack.c.l.b16 %v297
        %v440 = vunpack.c.l.b16 %v298
        %v441 = vunpack.c.l.b16 %v299
        %v442 = vunpack.c.l.b16 %v300
        %v443 = vunpack.c.l.b16 %v301
        %v444 = vunpack.c.l.b16 %v302
        %v445 = vunpack.c.l.b16 %v303
        %v446 = vunpack.c.l.b16 %v304
        %v447 = vunpack.c.l.b16 %v305
        %v448 = vunpack.c.l.b16 %v306
        %v449 = vunpack.c.l.b16 %v307
        %v450 = vunpack.c.l.b16 %v308
        %v451 = vunpack.c.l.b16 %v309
        %v452 = vunpack.c.l.b16 %v310
        %v453 = vunpack.c.l.b16 %v311
        %v454 = vunpack.c.l.b16 %v312
        %v455 = vunpack.c.l.b16 %v313
        %v456 = vunpack.c.l.b16 %v314
        %v457 = vunpack.c.l.b16 %v315
        %v458 = vunpack.c.l.b16 %v316
        %v459 = vunpack.c.l.b16 %v317
        %v460 = vunpack.c.l.b16 %v318
        %v461 = vunpack.c.l.b16 %v319
        %v462 = vunpack.c.l.b16 %v320
        %v463 = vunpack.c.l.b16 %v321
        %v464 = vunpack.c.l.b16 %v322
        %v465 = vunpack.c.l.b16 %v323
        %v466 = vunpack.c.l.b16 %v324
        %v467 = vunpack.c.l.b16 %v325
        %v468 = vunpack.c.l.b16 %v326
        %v469 = vunpack.c.l.b16 %v327
        %v470 = vunpack.c.l.b16 %v328
        %v471 = vunpack.c.l.b16 %v329
        %v472 = vunpack.c.l.b16 %v330
        %v473 = vunpack.c.l.b16 %v331
        %v474 = vunpack.c.l.b16 %v332
        %v475 = vunpack.c.l.b16 %v333
        %v476 = vunpack.c.l.b16 %v334
        %v477 = vunpack.c.l.b16 %v335
        %v478 = vpack.c.b16 %v415, %v414
        %v479 = vpack.c.b16 %v417, %v416
        %v480 = vpack.c.b16 %v419, %v418
        %v481 = vpack.c.b16 %v421, %v420
        %v482 = vpack.c.b16 %v423, %v422
        %v483 = vpack.c.b16 %v425, %v424
        %v484 = vpack.c.b16 %v427, %v426
        %v485 = vpack.c.b16 %v429, %v428
        %v486 = vpack.c.b16 %v431, %v430
        %v487 = vpack.c.b16 %v433, %v432
        %v488 = vpack.c.b16 %v435, %v434
        %v489 = vpack.c.b16 %v437, %v436
        %v490 = vpack.c.b16 %v439, %v438
        %v491 = vpack.c.b16 %v441, %v440
        %v492 = vpack.c.b16 %v443, %v442
        %v493 = vpack.c.b16 %v445, %v444
        %v494 = vpack.c.b16 %v447, %v446
        %v495 = vpack.c.b16 %v449, %v448
        %v496 = vpack.c.b16 %v451, %v450
        %v497 = vpack.c.b16 %v453, %v452
        %v498 = vpack.c.b16 %v455, %v454
        %v499 = vpack.c.b16 %v457, %v456
        %v500 = vpack.c.b16 %v459, %v458
        %v501 = vpack.c.b16 %v461, %v460
        %v502 = vpack.c.b16 %v463, %v462
        %v503 = vpack.c.b16 %v465, %v464
        %v504 = vpack.c.b16 %v467, %v466
        %v505 = vpack.c.b16 %v469, %v468
        %v506 = vpack.c.b16 %v471, %v470
        %v507 = vpack.c.b16 %v473, %v472
        %v508 = vpack.c.b16 %v475, %v474
        %v509 = vpack.c.b16 %v477, %v476
        %542 = vmatprep.subr.bf16.mxu0 0
        %543 = vmatpush1.bf16.msra.mxu0 %v478
        %544 = vmatprep.subr.bf16.mxu0 0
        %545 = vmatpush1.bf16.msra.mxu0 %v479
        %546 = vmatprep.subr.bf16.mxu0 0
        %547 = vmatpush1.bf16.msra.mxu0 %v480
        %548 = vmatprep.subr.bf16.mxu0 0
        %549 = vmatpush1.bf16.msra.mxu0 %v481
        %550 = vmatprep.subr.bf16.mxu0 0
        %551 = vmatpush1.bf16.msra.mxu0 %v482
        %552 = vmatprep.subr.bf16.mxu0 0
        %553 = vmatpush1.bf16.msra.mxu0 %v483
        %554 = vmatprep.subr.bf16.mxu0 0
        %555 = vmatpush1.bf16.msra.mxu0 %v484
        %556 = vmatprep.subr.bf16.mxu0 0
        %557 = vmatpush1.bf16.msra.mxu0 %v485
        %558 = vmatprep.subr.bf16.mxu0 0
        %559 = vmatpush1.bf16.msra.mxu0 %v486
        %560 = vmatprep.subr.bf16.mxu0 0
        %561 = vmatpush1.bf16.msra.mxu0 %v487
        %562 = vmatprep.subr.bf16.mxu0 0
        %563 = vmatpush1.bf16.msra.mxu0 %v488
        %564 = vmatprep.subr.bf16.mxu0 0
        %565 = vmatpush1.bf16.msra.mxu0 %v489
        %566 = vmatprep.subr.bf16.mxu0 0
        %567 = vmatpush1.bf16.msra.mxu0 %v490
        %568 = vmatprep.subr.bf16.mxu0 0
        %569 = vmatpush1.bf16.msra.mxu0 %v491
        %570 = vmatprep.subr.bf16.mxu0 0
        %571 = vmatpush1.bf16.msra.mxu0 %v492
        %572 = vmatprep.subr.bf16.mxu0 0
        %573 = vmatpush1.bf16.msra.mxu0 %v493
        %574 = vmatprep.mubr.bf16.mxu0 %v343
        %575 = vmatmul.mubr.bf16.gmra.mrb[0].mxu0 %v342
        %v576 = vpop.f32.mrb[0].mxu0
        %v577 = vadd.f32 0.0, %v576
        %v578 = vpop.f32.mrb[0].mxu0
        %v579 = vpop.f32.mrb[0].mxu0
        %v580 = vpop.f32.mrb[0].mxu0
        %581 = vdwg.mxu0
        %582 = vmatprep.subr.bf16.mxu0 0
        %583 = vmatpush1.bf16.msra.mxu0 %v494
        %584 = vmatprep.subr.bf16.mxu0 0
        %585 = vmatpush1.bf16.msra.mxu0 %v495
        %586 = vmatprep.subr.bf16.mxu0 0
        %587 = vmatpush1.bf16.msra.mxu0 %v496
        %588 = vmatprep.subr.bf16.mxu0 0
        %589 = vmatpush1.bf16.msra.mxu0 %v497
        %590 = vmatprep.subr.bf16.mxu0 0
        %591 = vmatpush1.bf16.msra.mxu0 %v498
        %592 = vmatprep.subr.bf16.mxu0 0
        %593 = vmatpush1.bf16.msra.mxu0 %v499
        %594 = vmatprep.subr.bf16.mxu0 0
        %595 = vmatpush1.bf16.msra.mxu0 %v500
        %596 = vmatprep.subr.bf16.mxu0 0
        %597 = vmatpush1.bf16.msra.mxu0 %v501
        %598 = vmatprep.subr.bf16.mxu0 0
        %599 = vmatpush1.bf16.msra.mxu0 %v502
        %600 = vmatprep.subr.bf16.mxu0 0
        %601 = vmatpush1.bf16.msra.mxu0 %v503
        %602 = vmatprep.subr.bf16.mxu0 0
        %603 = vmatpush1.bf16.msra.mxu0 %v504
        %604 = vmatprep.subr.bf16.mxu0 0
        %605 = vmatpush1.bf16.msra.mxu0 %v505
        %606 = vmatprep.subr.bf16.mxu0 0
        %607 = vmatpush1.bf16.msra.mxu0 %v506
        %608 = vmatprep.subr.bf16.mxu0 0
        %609 = vmatpush1.bf16.msra.mxu0 %v507
        %610 = vmatprep.subr.bf16.mxu0 0
        %611 = vmatpush1.bf16.msra.mxu0 %v508
        %612 = vmatprep.subr.bf16.mxu0 0
        %613 = vmatpush1.bf16.msra.mxu0 %v509
        %614 = vmatprep.mubr.bf16.mxu0 %v345
        %615 = vmatmul.mubr.bf16.gmra.mrb[0].mxu0 %v344
        %v616 = vpop.f32.mrb[0].mxu0
        %v617 = vadd.f32 %v577, %v616
        %v618 = vpop.f32.mrb[0].mxu0
        %v619 = vpop.f32.mrb[0].mxu0
        %v620 = vpop.f32.mrb[0].mxu0
        %621 = vdwg.mxu0
        %v622 = vld [vmem:[%s262] sm:$0xff]
        %v623 = vld [vmem:[%s219] sm:$0xff]
        %v624 = vmul.f32 %v617, %v623
        %625 = vadd.xlane.f32.xlu0 %v624
        %v626 = vpop.xlane.xlu0 %625
        %v627 = vadd.f32 %v622, %v626
        %vm628 = vcmask 7168
        %629 = vst.msk [vmem:[%s262] sm:$0xff] %vm628, %v627
        %p630 = scmp.lt.s32.totalorder %s22, 1
        %s631 = scalar_select %p630, %s22, 1
        %s632 = smul.addr %s631, 8
        %s633 = scalar_lea.vmem %s3, %s632
        // Predicated region
        $region49: #{tpu_custom_call.1} parent=31 // pred_check
          %p634 = pneg %p129
        $region50: #{tpu_custom_call.1} parent=31 // pred_check_branch
          %636 = sbr.rel (%p634) target = $region52
        $region51: #{tpu_custom_call.1} parent=31 // pred_region
          _
        $region52: #{tpu_custom_call.1} parent=31 // pred_fallthru
          _
      $region32: #{tpu_custom_call.1} parent=5 // pred_fallthru
        _
      %p637 = scmp.le.s32.totalorder 2, %s13
      // Predicated region
      $region53: #{tpu_custom_call.1} parent=5 // pred_check
        %p638 = pneg %p637
      $region54: #{tpu_custom_call.1} parent=5 // pred_check_branch
        %640 = sbr.rel (%p638) target = $region56
      $region55: #{tpu_custom_call.1} parent=5 // pred_region
        %s641 = ssub.s32 %s13, 2
        // Predicated region
        $region57: #{tpu_custom_call.1} parent=55 // pred_check
          %p642 = pneg %p135
        $region58: #{tpu_custom_call.1} parent=55 // pred_check_branch
          %644 = sbr.rel (%p642) target = $region60
        $region59: #{tpu_custom_call.1} parent=55 // pred_region
          %p645 = scmp.lt.s32.totalorder %s24, 1
          %s646 = scalar_select %p645, %s24, 1
          %s647 = smul.addr %s646, 8
          %s648 = scalar_lea.vmem %s3, %s647
        $region60: #{tpu_custom_call.1} parent=55 // pred_fallthru
          _
      $region56: #{tpu_custom_call.1} parent=5 // pred_fallthru
        _
    $region6: #{tpu_custom_call.1} parent=1 // loop_footer
      %s17 = sadd.s32 1, %s13
    $region7: #{tpu_custom_call.1} parent=1 // loop_footer_branch
      %12 = sbr.rel target = $region3
    $region8: #{tpu_custom_call.1} parent=1 // loop_exit
      _
    %649 = vsyncpa [#allocation3], 1
    %s650 = scalar_lea.sflag [#allocation3], 1
    %651 = vsyncpa %s650, 1
    %652 = vsyncpa [#allocation5], 1
    %s653 = scalar_lea.sflag [#allocation5], 1
    %654 = vsyncpa %s653, 1

</llo_original>
